<compile_context>
chip_gen: v6e
topology: v6e:2x2x1
jax: 0.10.0
libtpu: 0.0.40
codegen_flags: <defaults>
</compile_context>

<pallas_src>
import numpy as np
import jax
import jax.numpy as jnp
from jax.experimental import pallas as pl
from jax.experimental.pallas import tpu as pltpu

# Small synthetic shapes consistent with the module's forward.
B, S, D, H, FF, VOCAB = 2, 8, 32, 2, 64, 64
DH = D // H
BS = B * S


def _layernorm(x, g, b, eps=1e-12):
    mu = jnp.mean(x, axis=-1, keepdims=True)
    var = jnp.mean((x - mu) ** 2, axis=-1, keepdims=True)
    return (x - mu) * jax.lax.rsqrt(var + eps) * g + b


def encoder_kernel(x_ref, attn_bias_ref, mpool_ref,
                   wqkv_ref, wo_ref, wf1_ref, wf2_ref, bias_ref,
                   out_ref):
    x = x_ref[...]                               # (BS, D) f32, batch-folded embeddings
    xb = x.astype(jnp.bfloat16)                  # single bf16 operand for the MXU

    # ---- packed bias / LayerNorm parameters (static row slices) ----
    bqkv = bias_ref[0:1, 0:3 * D]                # (1, 3D)  (Q part pre-scaled)
    bo   = bias_ref[1:2, 0:D]
    g1   = bias_ref[2:3, 0:D]
    be1  = bias_ref[3:4, 0:D]
    bf1  = bias_ref[4:5, 0:FF]
    bf2  = bias_ref[5:6, 0:D]
    g2   = bias_ref[6:7, 0:D]
    be2  = bias_ref[7:8, 0:D]

    # ---- fused QKV projection: one MXU push, one bf16 cast ----
    qkv = jnp.dot(xb, wqkv_ref[...], preferred_element_type=jnp.float32) + bqkv  # (BS, 3D)
    qkv_b = qkv.astype(jnp.bfloat16)

    attn_bias = attn_bias_ref[...]               # (BS, BS) block-diag + key padding (-1e9)

    # ---- per-head attention on flattened 2-D tiles ----
    ctx_heads = []
    for h in range(H):                           # static unroll, H = 2
        qh = qkv_b[:, h * DH:(h + 1) * DH]                   # (BS, DH)
        kh = qkv_b[:, D + h * DH:D + (h + 1) * DH]           # (BS, DH)
        vh = qkv_b[:, 2 * D + h * DH:2 * D + (h + 1) * DH]   # (BS, DH)

        s = jnp.dot(qh, kh.T, preferred_element_type=jnp.float32) + attn_bias   # (BS, BS)
        s = s - jnp.max(s, axis=-1, keepdims=True)
        p = jnp.exp(s)
        # Softmax denominator on the EUP (approx reciprocal): frees VALU slots.
        p = p * pl.reciprocal(jnp.sum(p, axis=-1, keepdims=True), approx=True)

        ctx_heads.append(jnp.dot(p.astype(jnp.bfloat16), vh,
                                 preferred_element_type=jnp.float32))            # (BS, DH)

    # ---- single W_O application on the lane-concatenated heads ----
    ctx = jnp.concatenate(ctx_heads, axis=-1)    # (BS, D) f32
    attn = jnp.dot(ctx.astype(jnp.bfloat16), wo_ref[...],
                   preferred_element_type=jnp.float32) + bo

    h1 = _layernorm(x + attn, g1, be1)           # f32 elementwise

    ff = jnp.dot(h1.astype(jnp.bfloat16), wf1_ref[...],
                 preferred_element_type=jnp.float32) + bf1
    ff = jax.nn.gelu(ff)  # tanh approximation; TODO(synk): HF BERT uses erf GELU
    ff = jnp.dot(ff.astype(jnp.bfloat16), wf2_ref[...],
                 preferred_element_type=jnp.float32) + bf2
    h2 = _layernorm(h1 + ff, g2, be2)            # (BS, D)

    # ---- masked mean pooling (VPU multiply + sublane reduce) + L2 normalize ----
    # Pooling weights (mask / clamp(len)) are precomputed in the wrapper, so
    # the masked sum and the mean divide collapse into one broadcast-multiply;
    # no MXU push and no in-kernel mask reduction needed.
    weighted = h2.reshape(B, S, D) * mpool_ref[...]          # (B, S, D)
    pooled = jnp.sum(weighted, axis=1)                       # (B, D)
    nsq = jnp.sum(pooled * pooled, axis=-1, keepdims=True)
    out_ref[...] = pooled * jax.lax.rsqrt(jnp.maximum(nsq, 1e-24))  # == /max(||x||,1e-12)


def prepare_params(params):
    """Wrapper-side weight prep: keep QKV fused (Q columns pre-scaled by
    1/sqrt(DH)), cast matmul weights to bf16, pack the eight small bias /
    LayerNorm vectors into one padded (8, 128) f32 block."""
    scale = 1.0 / np.sqrt(DH)
    wqkv = params["wqkv"].at[:, :D].multiply(scale)          # (D, 3D), Q part scaled
    bqkv = params["bqkv"].reshape(-1).at[:D].multiply(scale)  # (3D,)

    bias_pack = jnp.zeros((8, 128), jnp.float32)
    bias_pack = bias_pack.at[0, :3 * D].set(bqkv)
    bias_pack = bias_pack.at[1, :D].set(params["bo"].reshape(-1))
    bias_pack = bias_pack.at[2, :D].set(params["g1"].reshape(-1))
    bias_pack = bias_pack.at[3, :D].set(params["be1"].reshape(-1))
    bias_pack = bias_pack.at[4, :FF].set(params["bf1"].reshape(-1))
    bias_pack = bias_pack.at[5, :D].set(params["bf2"].reshape(-1))
    bias_pack = bias_pack.at[6, :D].set(params["g2"].reshape(-1))
    bias_pack = bias_pack.at[7, :D].set(params["be2"].reshape(-1))

    bf16 = lambda t: t.astype(jnp.bfloat16)
    return {
        "word_emb": params["word_emb"], "pos_emb": params["pos_emb"],
        "wqkv": bf16(wqkv), "wo": bf16(params["wo"]),
        "wf1": bf16(params["wf1"]), "wf2": bf16(params["wf2"]),
        "bias_pack": bias_pack,
    }


def encoder_forward(params, input_ids, attention_mask):
    prep = prepare_params(params)

    # Glue in plain JAX: embedding gather, batch folding, mask/pooling prep.
    x = (prep["word_emb"][input_ids] + prep["pos_emb"][None]).astype(jnp.float32)
    x = x.reshape(BS, D)

    m = attention_mask.astype(jnp.float32)                              # (B, S)
    # Additive attention bias for the flattened (BS, BS) score matrix:
    # -1e9 across sequences (block-diagonal) and on padded key tokens.
    key_bias_flat = ((1.0 - m) * (-1e9)).reshape(BS)                    # (BS,)
    seq_id = jnp.repeat(jnp.arange(B, dtype=jnp.int32), S)              # (BS,)
    same_seq = seq_id[:, None] == seq_id[None, :]
    attn_bias = jnp.where(same_seq, key_bias_flat[None, :], -1e9).astype(jnp.float32)

    # Pooling weights = mask / clamp(mask_sum), in the (B, S, 1) layout the
    # kernel multiplies with directly.
    m_pool = (m / jnp.clip(jnp.sum(m, axis=-1, keepdims=True), 1e-9))[..., None]

    def full(shape):   # full-array block, single grid step
        return pl.BlockSpec(shape, lambda i, _n=len(shape): (0,) * _n)

    in_specs = [
        full((BS, D)),        # x (batch-folded embeddings)
        full((BS, BS)),       # additive attention bias (block-diag + padding)
        full((B, S, 1)),      # pooling weights
        full((D, 3 * D)),     # fused QKV weight, bf16
        full((D, D)),         # wo, bf16
        full((D, FF)),        # ffn w1, bf16
        full((FF, D)),        # ffn w2, bf16
        full((8, 128)),       # packed biases / LayerNorm params, f32
    ]

    out = pl.pallas_call(
        encoder_kernel,
        out_shape=jax.ShapeDtypeStruct((B, D), jnp.float32),
        grid_spec=pltpu.PrefetchScalarGridSpec(
            num_scalar_prefetch=0,
            grid=(1,),   # single step: batch fully folded (1 TC on v5e/v6e; not worth splitting on v7x at this size)
            in_specs=in_specs,
            out_specs=pl.BlockSpec((B, D), lambda i: (0, 0)),
        ),
        compiler_params=pltpu.CompilerParams(dimension_semantics=("arbitrary",)),
    )(x, attn_bias, m_pool,
      prep["wqkv"], prep["wo"], prep["wf1"], prep["wf2"], prep["bias_pack"])
    return out


def reference_forward(prep, input_ids, attention_mask):
    """Pure-JAX reference using the same prepped weights and precision policy
    (bf16 matmul inputs, f32 accumulation/elementwise), standard per-sequence
    attention layout."""
    bias = prep["bias_pack"]
    bqkv = bias[0, :3 * D]; bo = bias[1, :D]
    g1 = bias[2, :D]; be1 = bias[3, :D]
    bf1 = bias[4, :FF]; bf2 = bias[5, :D]
    g2 = bias[6, :D]; be2 = bias[7, :D]

    x = (prep["word_emb"][input_ids] + prep["pos_emb"][None]).astype(jnp.float32)  # (B,S,D)
    xb = x.astype(jnp.bfloat16)
    m = attention_mask.astype(jnp.float32)                                          # (B,S)
    key_bias = ((1.0 - m) * (-1e9))[:, None, :]                                     # (B,1,S)

    qkv = jnp.einsum("bsd,de->bse", xb, prep["wqkv"],
                     preferred_element_type=jnp.float32) + bqkv                     # (B,S,3D)
    qkvb = qkv.astype(jnp.bfloat16)

    ctx_heads = []
    for h in range(H):
        qh = qkvb[..., h * DH:(h + 1) * DH]
        kh = qkvb[..., D + h * DH:D + (h + 1) * DH]
        vh = qkvb[..., 2 * D + h * DH:2 * D + (h + 1) * DH]
        s = jnp.einsum("bqe,bke->bqk", qh, kh,
                       preferred_element_type=jnp.float32) + key_bias
        p = jax.nn.softmax(s, axis=-1)
        ctx_heads.append(jnp.einsum("bqk,bke->bqe", p.astype(jnp.bfloat16), vh,
                                    preferred_element_type=jnp.float32))
    ctx = jnp.concatenate(ctx_heads, axis=-1)                                        # (B,S,D)
    attn = jnp.einsum("bsd,de->bse", ctx.astype(jnp.bfloat16), prep["wo"],
                      preferred_element_type=jnp.float32) + bo
    h1 = _layernorm(x + attn, g1, be1)
    ff = jnp.einsum("bsd,df->bsf", h1.astype(jnp.bfloat16), prep["wf1"],
                    preferred_element_type=jnp.float32) + bf1
    ff = jax.nn.gelu(ff)
    ff = jnp.einsum("bsf,fd->bsd", ff.astype(jnp.bfloat16), prep["wf2"],
                    preferred_element_type=jnp.float32) + bf2
    h2 = _layernorm(h1 + ff, g2, be2)
    mask_ = m[..., None]
    pooled = jnp.sum(h2 * mask_, axis=-2) / jnp.clip(jnp.sum(mask_, axis=-2), 1e-9)
    return pooled / jnp.maximum(jnp.linalg.norm(pooled, axis=-1, keepdims=True), 1e-12)


def init_params(key):
    ks = jax.random.split(key, 6)
    s = 0.02
    return {
        "word_emb": s * jax.random.normal(ks[0], (VOCAB, D), jnp.float32),
        "pos_emb": s * jax.random.normal(ks[1], (S, D), jnp.float32),
        "wqkv": s * jax.random.normal(ks[2], (D, 3 * D), jnp.float32),
        "bqkv": jnp.zeros((1, 3 * D), jnp.float32),
        "wo": s * jax.random.normal(ks[3], (D, D), jnp.float32),
        "bo": jnp.zeros((1, D), jnp.float32),
        "g1": jnp.ones((1, D), jnp.float32),
        "be1": jnp.zeros((1, D), jnp.float32),
        "wf1": s * jax.random.normal(ks[4], (D, FF), jnp.float32),
        "bf1": jnp.zeros((1, FF), jnp.float32),
        "wf2": s * jax.random.normal(ks[5], (FF, D), jnp.float32),
        "bf2": jnp.zeros((1, D), jnp.float32),
        "g2": jnp.ones((1, D), jnp.float32),
        "be2": jnp.zeros((1, D), jnp.float32),
    }


if __name__ == "__main__":
    key = jax.random.PRNGKey(0)
    pkey, ikey = jax.random.split(key)
    params = init_params(pkey)

    input_ids = jax.random.randint(ikey, (B, S), 0, VOCAB, dtype=jnp.int32)
    lengths = jnp.array([S, 5], dtype=jnp.int32)
    attention_mask = (jnp.arange(S)[None, :] < lengths[:, None]).astype(jnp.int32)

    out = jax.block_until_ready(encoder_forward(params, input_ids, attention_mask))
    ref = reference_forward(prepare_params(params), input_ids, attention_mask)

    assert out.shape == (B, D), out.shape
    assert np.all(np.isfinite(np.asarray(out)))
    if not np.allclose(np.asarray(out), np.asarray(ref), atol=2e-3, rtol=2e-3):
        raise AssertionError("Pallas kernel output mismatch vs JAX reference")
    print("KERNEL_OK")
</pallas_src>

<mosaic_0001>
module attributes {stable_mosaic.version = 11 : i64} {
  func.func @encoder_kernel(%arg0: i32, %arg1: memref<16x32xf32, #tpu.memory_space<vmem>>, %arg2: memref<16x16xf32, #tpu.memory_space<vmem>>, %arg3: memref<2x8x1xf32, #tpu.memory_space<vmem>>, %arg4: memref<32x96xbf16, #tpu.memory_space<vmem>>, %arg5: memref<32x32xbf16, #tpu.memory_space<vmem>>, %arg6: memref<32x64xbf16, #tpu.memory_space<vmem>>, %arg7: memref<64x32xbf16, #tpu.memory_space<vmem>>, %arg8: memref<8x128xf32, #tpu.memory_space<vmem>>, %arg9: memref<2x32xf32, #tpu.memory_space<vmem>>) attributes {dimension_semantics = [#tpu.dimension_semantics<arbitrary>], iteration_bounds = array<i64: 1>, scalar_prefetch = 0 : i64, scratch_operands = 0 : i64, tpu.core_type = #tpu.core_type<tc>, window_params = [{pipeline_mode = #tpu.pipeline_mode<synchronous>, transform_indices = @transform_0, window_bounds = array<i64: 16, 32>}, {pipeline_mode = #tpu.pipeline_mode<synchronous>, transform_indices = @transform_1, window_bounds = array<i64: 16, 16>}, {pipeline_mode = #tpu.pipeline_mode<synchronous>, transform_indices = @transform_2, window_bounds = array<i64: 2, 8, 1>}, {pipeline_mode = #tpu.pipeline_mode<synchronous>, transform_indices = @transform_3, window_bounds = array<i64: 32, 96>}, {pipeline_mode = #tpu.pipeline_mode<synchronous>, transform_indices = @transform_4, window_bounds = array<i64: 32, 32>}, {pipeline_mode = #tpu.pipeline_mode<synchronous>, transform_indices = @transform_5, window_bounds = array<i64: 32, 64>}, {pipeline_mode = #tpu.pipeline_mode<synchronous>, transform_indices = @transform_6, window_bounds = array<i64: 64, 32>}, {pipeline_mode = #tpu.pipeline_mode<synchronous>, transform_indices = @transform_7, window_bounds = array<i64: 8, 128>}, {pipeline_mode = #tpu.pipeline_mode<synchronous>, transform_indices = @transform_8, window_bounds = array<i64: 2, 32>}]} {
    %c0 = arith.constant 0 : index
    %c0_0 = arith.constant 0 : index
    %0 = vector.load %arg1[%c0, %c0_0] : memref<16x32xf32, #tpu.memory_space<vmem>>, vector<16x32xf32>
    %1 = arith.truncf %0 : vector<16x32xf32> to vector<16x32xbf16>
    %c0_1 = arith.constant 0 : index
    %c0_2 = arith.constant 0 : index
    %2 = vector.load %arg8[%c0_1, %c0_2] : memref<8x128xf32, #tpu.memory_space<vmem>>, vector<1x96xf32>
    %c1 = arith.constant 1 : index
    %c0_3 = arith.constant 0 : index
    %3 = vector.load %arg8[%c1, %c0_3] : memref<8x128xf32, #tpu.memory_space<vmem>>, vector<1x32xf32>
    %c2 = arith.constant 2 : index
    %c0_4 = arith.constant 0 : index
    %4 = vector.load %arg8[%c2, %c0_4] : memref<8x128xf32, #tpu.memory_space<vmem>>, vector<1x32xf32>
    %c3 = arith.constant 3 : index
    %c0_5 = arith.constant 0 : index
    %5 = vector.load %arg8[%c3, %c0_5] : memref<8x128xf32, #tpu.memory_space<vmem>>, vector<1x32xf32>
    %c4 = arith.constant 4 : index
    %c0_6 = arith.constant 0 : index
    %6 = vector.load %arg8[%c4, %c0_6] : memref<8x128xf32, #tpu.memory_space<vmem>>, vector<1x64xf32>
    %c5 = arith.constant 5 : index
    %c0_7 = arith.constant 0 : index
    %7 = vector.load %arg8[%c5, %c0_7] : memref<8x128xf32, #tpu.memory_space<vmem>>, vector<1x32xf32>
    %c6 = arith.constant 6 : index
    %c0_8 = arith.constant 0 : index
    %8 = vector.load %arg8[%c6, %c0_8] : memref<8x128xf32, #tpu.memory_space<vmem>>, vector<1x32xf32>
    %c7 = arith.constant 7 : index
    %c0_9 = arith.constant 0 : index
    %9 = vector.load %arg8[%c7, %c0_9] : memref<8x128xf32, #tpu.memory_space<vmem>>, vector<1x32xf32>
    %c0_10 = arith.constant 0 : index
    %c0_11 = arith.constant 0 : index
    %10 = vector.load %arg4[%c0_10, %c0_11] : memref<32x96xbf16, #tpu.memory_space<vmem>>, vector<32x96xbf16>
    %cst = arith.constant dense<0.000000e+00> : vector<16x96xf32>
    %11 = tpu.matmul %1, %10, %cst {dimension_numbers = #tpu.dot_dimension_numbers<[1], [0], [0], [1], [0, 0, 1, 1], [], []>} : vector<16x32xbf16>, vector<32x96xbf16>, vector<16x96xf32> -> vector<16x96xf32>
    %12 = vector.broadcast %2 : vector<1x96xf32> to vector<16x96xf32>
    %13 = arith.addf %11, %12 : vector<16x96xf32>
    %14 = arith.truncf %13 : vector<16x96xf32> to vector<16x96xbf16>
    %c0_12 = arith.constant 0 : index
    %c0_13 = arith.constant 0 : index
    %15 = vector.load %arg2[%c0_12, %c0_13] : memref<16x16xf32, #tpu.memory_space<vmem>>, vector<16x16xf32>
    %16 = vector.extract_strided_slice %14 {offsets = [0, 0], sizes = [16, 16], strides = [1, 1]} : vector<16x96xbf16> to vector<16x16xbf16>
    %17 = vector.extract_strided_slice %14 {offsets = [0, 32], sizes = [16, 16], strides = [1, 1]} : vector<16x96xbf16> to vector<16x16xbf16>
    %18 = vector.extract_strided_slice %14 {offsets = [0, 64], sizes = [16, 16], strides = [1, 1]} : vector<16x96xbf16> to vector<16x16xbf16>
    %19 = tpu.transpose %17, [1, 0] : vector<16x16xbf16> -> vector<16x16xbf16>
    %cst_14 = arith.constant dense<0.000000e+00> : vector<16x16xf32>
    %20 = tpu.matmul %16, %19, %cst_14 {dimension_numbers = #tpu.dot_dimension_numbers<[1], [0], [0], [1], [0, 0, 1, 1], [], []>} : vector<16x16xbf16>, vector<16x16xbf16>, vector<16x16xf32> -> vector<16x16xf32>
    %21 = arith.addf %20, %15 : vector<16x16xf32>
    %cst_15 = arith.constant dense<0xFF800000> : vector<16xf32>
    %22 = vector.multi_reduction <maximumf>, %21, %cst_15 [1] : vector<16x16xf32> to vector<16xf32>
    %23 = vector.shape_cast %22 : vector<16xf32> to vector<16x1xf32>
    %24 = vector.broadcast %23 : vector<16x1xf32> to vector<16x16xf32>
    %25 = arith.subf %21, %24 : vector<16x16xf32>
    %26 = math.exp %25 : vector<16x16xf32>
    %cst_16 = arith.constant dense<0.000000e+00> : vector<16xf32>
    %27 = vector.multi_reduction <add>, %26, %cst_16 [1] : vector<16x16xf32> to vector<16xf32>
    %28 = vector.shape_cast %27 : vector<16xf32> to vector<16x1xf32>
    %29 = tpu.reciprocal %28 {approx = true} : vector<16x1xf32> -> vector<16x1xf32>
    %30 = vector.broadcast %29 : vector<16x1xf32> to vector<16x16xf32>
    %31 = arith.mulf %26, %30 : vector<16x16xf32>
    %32 = arith.truncf %31 : vector<16x16xf32> to vector<16x16xbf16>
    %cst_17 = arith.constant dense<0.000000e+00> : vector<16x16xf32>
    %33 = tpu.matmul %32, %18, %cst_17 {dimension_numbers = #tpu.dot_dimension_numbers<[1], [0], [0], [1], [0, 0, 1, 1], [], []>} : vector<16x16xbf16>, vector<16x16xbf16>, vector<16x16xf32> -> vector<16x16xf32>
    %34 = vector.extract_strided_slice %14 {offsets = [0, 16], sizes = [16, 16], strides = [1, 1]} : vector<16x96xbf16> to vector<16x16xbf16>
    %35 = vector.extract_strided_slice %14 {offsets = [0, 48], sizes = [16, 16], strides = [1, 1]} : vector<16x96xbf16> to vector<16x16xbf16>
    %36 = vector.extract_strided_slice %14 {offsets = [0, 80], sizes = [16, 16], strides = [1, 1]} : vector<16x96xbf16> to vector<16x16xbf16>
    %37 = tpu.transpose %35, [1, 0] : vector<16x16xbf16> -> vector<16x16xbf16>
    %cst_18 = arith.constant dense<0.000000e+00> : vector<16x16xf32>
    %38 = tpu.matmul %34, %37, %cst_18 {dimension_numbers = #tpu.dot_dimension_numbers<[1], [0], [0], [1], [0, 0, 1, 1], [], []>} : vector<16x16xbf16>, vector<16x16xbf16>, vector<16x16xf32> -> vector<16x16xf32>
    %39 = arith.addf %38, %15 : vector<16x16xf32>
    %cst_19 = arith.constant dense<0xFF800000> : vector<16xf32>
    %40 = vector.multi_reduction <maximumf>, %39, %cst_19 [1] : vector<16x16xf32> to vector<16xf32>
    %41 = vector.shape_cast %40 : vector<16xf32> to vector<16x1xf32>
    %42 = vector.broadcast %41 : vector<16x1xf32> to vector<16x16xf32>
    %43 = arith.subf %39, %42 : vector<16x16xf32>
    %44 = math.exp %43 : vector<16x16xf32>
    %cst_20 = arith.constant dense<0.000000e+00> : vector<16xf32>
    %45 = vector.multi_reduction <add>, %44, %cst_20 [1] : vector<16x16xf32> to vector<16xf32>
    %46 = vector.shape_cast %45 : vector<16xf32> to vector<16x1xf32>
    %47 = tpu.reciprocal %46 {approx = true} : vector<16x1xf32> -> vector<16x1xf32>
    %48 = vector.broadcast %47 : vector<16x1xf32> to vector<16x16xf32>
    %49 = arith.mulf %44, %48 : vector<16x16xf32>
    %50 = arith.truncf %49 : vector<16x16xf32> to vector<16x16xbf16>
    %cst_21 = arith.constant dense<0.000000e+00> : vector<16x16xf32>
    %51 = tpu.matmul %50, %36, %cst_21 {dimension_numbers = #tpu.dot_dimension_numbers<[1], [0], [0], [1], [0, 0, 1, 1], [], []>} : vector<16x16xbf16>, vector<16x16xbf16>, vector<16x16xf32> -> vector<16x16xf32>
    %52 = tpu.concatenate %33, %51 in 1 : vector<16x16xf32>, vector<16x16xf32> -> vector<16x32xf32>
    %53 = arith.truncf %52 : vector<16x32xf32> to vector<16x32xbf16>
    %c0_22 = arith.constant 0 : index
    %c0_23 = arith.constant 0 : index
    %54 = vector.load %arg5[%c0_22, %c0_23] : memref<32x32xbf16, #tpu.memory_space<vmem>>, vector<32x32xbf16>
    %cst_24 = arith.constant dense<0.000000e+00> : vector<16x32xf32>
    %55 = tpu.matmul %53, %54, %cst_24 {dimension_numbers = #tpu.dot_dimension_numbers<[1], [0], [0], [1], [0, 0, 1, 1], [], []>} : vector<16x32xbf16>, vector<32x32xbf16>, vector<16x32xf32> -> vector<16x32xf32>
    %56 = vector.broadcast %3 : vector<1x32xf32> to vector<16x32xf32>
    %57 = arith.addf %55, %56 : vector<16x32xf32>
    %58 = arith.addf %0, %57 : vector<16x32xf32>
    %cst_25 = arith.constant dense<0.000000e+00> : vector<16xf32>
    %59 = vector.multi_reduction <add>, %58, %cst_25 [1] : vector<16x32xf32> to vector<16xf32>
    %60 = vector.shape_cast %59 : vector<16xf32> to vector<16x1xf32>
    %cst_26 = arith.constant 3.200000e+01 : f32
    %61 = vector.broadcast %cst_26 : f32 to vector<16x1xf32>
    %62 = arith.divf %60, %61 : vector<16x1xf32>
    %63 = vector.broadcast %62 : vector<16x1xf32> to vector<16x32xf32>
    %64 = arith.subf %58, %63 : vector<16x32xf32>
    %65 = arith.mulf %64, %64 : vector<16x32xf32>
    %cst_27 = arith.constant dense<0.000000e+00> : vector<16xf32>
    %66 = vector.multi_reduction <add>, %65, %cst_27 [1] : vector<16x32xf32> to vector<16xf32>
    %67 = vector.shape_cast %66 : vector<16xf32> to vector<16x1xf32>
    %cst_28 = arith.constant 3.200000e+01 : f32
    %68 = vector.broadcast %cst_28 : f32 to vector<16x1xf32>
    %69 = arith.divf %67, %68 : vector<16x1xf32>
    %70 = vector.broadcast %62 : vector<16x1xf32> to vector<16x32xf32>
    %71 = arith.subf %58, %70 : vector<16x32xf32>
    %cst_29 = arith.constant 9.99999996E-13 : f32
    %72 = vector.broadcast %cst_29 : f32 to vector<16x1xf32>
    %73 = arith.addf %69, %72 : vector<16x1xf32>
    %74 = math.rsqrt %73 : vector<16x1xf32>
    %75 = vector.broadcast %74 : vector<16x1xf32> to vector<16x32xf32>
    %76 = arith.mulf %71, %75 : vector<16x32xf32>
    %77 = vector.broadcast %4 : vector<1x32xf32> to vector<16x32xf32>
    %78 = arith.mulf %76, %77 : vector<16x32xf32>
    %79 = vector.broadcast %5 : vector<1x32xf32> to vector<16x32xf32>
    %80 = arith.addf %78, %79 : vector<16x32xf32>
    %81 = arith.truncf %80 : vector<16x32xf32> to vector<16x32xbf16>
    %c0_30 = arith.constant 0 : index
    %c0_31 = arith.constant 0 : index
    %82 = vector.load %arg6[%c0_30, %c0_31] : memref<32x64xbf16, #tpu.memory_space<vmem>>, vector<32x64xbf16>
    %cst_32 = arith.constant dense<0.000000e+00> : vector<16x64xf32>
    %83 = tpu.matmul %81, %82, %cst_32 {dimension_numbers = #tpu.dot_dimension_numbers<[1], [0], [0], [1], [0, 0, 1, 1], [], []>} : vector<16x32xbf16>, vector<32x64xbf16>, vector<16x64xf32> -> vector<16x64xf32>
    %84 = vector.broadcast %6 : vector<1x64xf32> to vector<16x64xf32>
    %85 = arith.addf %83, %84 : vector<16x64xf32>
    %86 = arith.mulf %85, %85 : vector<16x64xf32>
    %87 = arith.mulf %85, %86 : vector<16x64xf32>
    %cst_33 = arith.constant 4.471500e-02 : f32
    %88 = vector.broadcast %cst_33 : f32 to vector<16x64xf32>
    %89 = arith.mulf %88, %87 : vector<16x64xf32>
    %90 = arith.addf %85, %89 : vector<16x64xf32>
    %cst_34 = arith.constant 0.797884583 : f32
    %91 = vector.broadcast %cst_34 : f32 to vector<16x64xf32>
    %92 = arith.mulf %91, %90 : vector<16x64xf32>
    %93 = math.tanh %92 : vector<16x64xf32>
    %cst_35 = arith.constant 1.000000e+00 : f32
    %94 = vector.broadcast %cst_35 : f32 to vector<16x64xf32>
    %95 = arith.addf %94, %93 : vector<16x64xf32>
    %cst_36 = arith.constant 5.000000e-01 : f32
    %96 = vector.broadcast %cst_36 : f32 to vector<16x64xf32>
    %97 = arith.mulf %96, %95 : vector<16x64xf32>
    %98 = arith.mulf %85, %97 : vector<16x64xf32>
    %99 = arith.truncf %98 : vector<16x64xf32> to vector<16x64xbf16>
    %c0_37 = arith.constant 0 : index
    %c0_38 = arith.constant 0 : index
    %100 = vector.load %arg7[%c0_37, %c0_38] : memref<64x32xbf16, #tpu.memory_space<vmem>>, vector<64x32xbf16>
    %cst_39 = arith.constant dense<0.000000e+00> : vector<16x32xf32>
    %101 = tpu.matmul %99, %100, %cst_39 {dimension_numbers = #tpu.dot_dimension_numbers<[1], [0], [0], [1], [0, 0, 1, 1], [], []>} : vector<16x64xbf16>, vector<64x32xbf16>, vector<16x32xf32> -> vector<16x32xf32>
    %102 = vector.broadcast %7 : vector<1x32xf32> to vector<16x32xf32>
    %103 = arith.addf %101, %102 : vector<16x32xf32>
    %104 = arith.addf %80, %103 : vector<16x32xf32>
    %cst_40 = arith.constant dense<0.000000e+00> : vector<16xf32>
    %105 = vector.multi_reduction <add>, %104, %cst_40 [1] : vector<16x32xf32> to vector<16xf32>
    %106 = vector.shape_cast %105 : vector<16xf32> to vector<16x1xf32>
    %cst_41 = arith.constant 3.200000e+01 : f32
    %107 = vector.broadcast %cst_41 : f32 to vector<16x1xf32>
    %108 = arith.divf %106, %107 : vector<16x1xf32>
    %109 = vector.broadcast %108 : vector<16x1xf32> to vector<16x32xf32>
    %110 = arith.subf %104, %109 : vector<16x32xf32>
    %111 = arith.mulf %110, %110 : vector<16x32xf32>
    %cst_42 = arith.constant dense<0.000000e+00> : vector<16xf32>
    %112 = vector.multi_reduction <add>, %111, %cst_42 [1] : vector<16x32xf32> to vector<16xf32>
    %113 = vector.shape_cast %112 : vector<16xf32> to vector<16x1xf32>
    %cst_43 = arith.constant 3.200000e+01 : f32
    %114 = vector.broadcast %cst_43 : f32 to vector<16x1xf32>
    %115 = arith.divf %113, %114 : vector<16x1xf32>
    %116 = vector.broadcast %108 : vector<16x1xf32> to vector<16x32xf32>
    %117 = arith.subf %104, %116 : vector<16x32xf32>
    %cst_44 = arith.constant 9.99999996E-13 : f32
    %118 = vector.broadcast %cst_44 : f32 to vector<16x1xf32>
    %119 = arith.addf %115, %118 : vector<16x1xf32>
    %120 = math.rsqrt %119 : vector<16x1xf32>
    %121 = vector.broadcast %120 : vector<16x1xf32> to vector<16x32xf32>
    %122 = arith.mulf %117, %121 : vector<16x32xf32>
    %123 = vector.broadcast %8 : vector<1x32xf32> to vector<16x32xf32>
    %124 = arith.mulf %122, %123 : vector<16x32xf32>
    %125 = vector.broadcast %9 : vector<1x32xf32> to vector<16x32xf32>
    %126 = arith.addf %124, %125 : vector<16x32xf32>
    %127 = vector.shape_cast %126 : vector<16x32xf32> to vector<2x8x32xf32>
    %c0_45 = arith.constant 0 : index
    %c0_46 = arith.constant 0 : index
    %c0_47 = arith.constant 0 : index
    %128 = vector.load %arg3[%c0_45, %c0_46, %c0_47] : memref<2x8x1xf32, #tpu.memory_space<vmem>>, vector<2x8x1xf32>
    %129 = vector.broadcast %128 : vector<2x8x1xf32> to vector<2x8x32xf32>
    %130 = arith.mulf %127, %129 : vector<2x8x32xf32>
    %cst_48 = arith.constant dense<0.000000e+00> : vector<2x32xf32>
    %131 = vector.multi_reduction <add>, %130, %cst_48 [1] : vector<2x8x32xf32> to vector<2x32xf32>
    %132 = arith.mulf %131, %131 : vector<2x32xf32>
    %cst_49 = arith.constant dense<0.000000e+00> : vector<2xf32>
    %133 = vector.multi_reduction <add>, %132, %cst_49 [1] : vector<2x32xf32> to vector<2xf32>
    %134 = vector.shape_cast %133 : vector<2xf32> to vector<2x1xf32>
    %cst_50 = arith.constant 1.000000e-24 : f32
    %135 = vector.broadcast %cst_50 : f32 to vector<2x1xf32>
    %136 = arith.maximumf %134, %135 : vector<2x1xf32>
    %137 = math.rsqrt %136 : vector<2x1xf32>
    %138 = vector.broadcast %137 : vector<2x1xf32> to vector<2x32xf32>
    %139 = arith.mulf %131, %138 : vector<2x32xf32>
    %c0_51 = arith.constant 0 : index
    %c0_52 = arith.constant 0 : index
    %140 = vector.load %arg9[%c0_51, %c0_52] : memref<2x32xf32, #tpu.memory_space<vmem>>, vector<2x32xf32>
    tpu.vector_store %arg9[%c0_51, %c0_52], %139 {strides = array<i32>} : memref<2x32xf32, #tpu.memory_space<vmem>>, vector<2x32xf32>,
    return
  }
  func.func @transform_0(%arg0: i32) -> (i32, i32) {
    %c0_i32 = arith.constant 0 : i32
    %c0_i32_0 = arith.constant 0 : i32
    %c0_i32_1 = arith.constant 0 : i32
    return %c0_i32, %c0_i32_0 : i32, i32
  }
  func.func @transform_1(%arg0: i32) -> (i32, i32) {
    %c0_i32 = arith.constant 0 : i32
    %c0_i32_0 = arith.constant 0 : i32
    %c0_i32_1 = arith.constant 0 : i32
    return %c0_i32, %c0_i32_0 : i32, i32
  }
  func.func @transform_2(%arg0: i32) -> (i32, i32, i32) {
    %c0_i32 = arith.constant 0 : i32
    %c0_i32_0 = arith.constant 0 : i32
    %c0_i32_1 = arith.constant 0 : i32
    %c0_i32_2 = arith.constant 0 : i32
    return %c0_i32, %c0_i32_0, %c0_i32_1 : i32, i32, i32
  }
  func.func @transform_3(%arg0: i32) -> (i32, i32) {
    %c0_i32 = arith.constant 0 : i32
    %c0_i32_0 = arith.constant 0 : i32
    %c0_i32_1 = arith.constant 0 : i32
    return %c0_i32, %c0_i32_0 : i32, i32
  }
  func.func @transform_4(%arg0: i32) -> (i32, i32) {
    %c0_i32 = arith.constant 0 : i32
    %c0_i32_0 = arith.constant 0 : i32
    %c0_i32_1 = arith.constant 0 : i32
    return %c0_i32, %c0_i32_0 : i32, i32
  }
  func.func @transform_5(%arg0: i32) -> (i32, i32) {
    %c0_i32 = arith.constant 0 : i32
    %c0_i32_0 = arith.constant 0 : i32
    %c0_i32_1 = arith.constant 0 : i32
    return %c0_i32, %c0_i32_0 : i32, i32
  }
  func.func @transform_6(%arg0: i32) -> (i32, i32) {
    %c0_i32 = arith.constant 0 : i32
    %c0_i32_0 = arith.constant 0 : i32
    %c0_i32_1 = arith.constant 0 : i32
    return %c0_i32, %c0_i32_0 : i32, i32
  }
  func.func @transform_7(%arg0: i32) -> (i32, i32) {
    %c0_i32 = arith.constant 0 : i32
    %c0_i32_0 = arith.constant 0 : i32
    %c0_i32_1 = arith.constant 0 : i32
    return %c0_i32, %c0_i32_0 : i32, i32
  }
  func.func @transform_8(%arg0: i32) -> (i32, i32) {
    %c0_i32 = arith.constant 0 : i32
    %c0_i32_0 = arith.constant 0 : i32
    %c0_i32_1 = arith.constant 0 : i32
    return %c0_i32, %c0_i32_0 : i32, i32
  }
}

</mosaic_0001>

<llo_original>
// kernel: tpu_custom_call.1
$region0: #{tpu_custom_call.1}
  #allocation0 [shape = 'u32[]', space=smem, size = 0x4, offset = 0x4, fixed_abs, tag = 'smem constant byte address 0x4 - core index']
  #allocation1 [shape = 'u32[144,128]{1,0:T(1,128)}', space=vmem, size = 0x12000, scoped, tag = 'internal scratch']
  %s0 = inlined_call_operand.vmem [shape: f32[16,32], index: 0, kind: input, shape index: {}]
  %s1 = inlined_call_operand.vmem [shape: f32[16,16], index: 1, kind: input, shape index: {}]
  %s2 = inlined_call_operand.vmem [shape: f32[2,8,1], index: 2, kind: input, shape index: {}]
  %s3 = inlined_call_operand.vmem [shape: bf16[32,96], index: 3, kind: input, shape index: {}]
  %s4 = inlined_call_operand.vmem [shape: bf16[32,32], index: 4, kind: input, shape index: {}]
  %s5 = inlined_call_operand.hbm [shape: bf16[32,64], index: 5, kind: input, shape index: {}]
  %s6 = inlined_call_operand.vmem [shape: bf16[64,32], index: 6, kind: input, shape index: {}]
  %s7 = inlined_call_operand.vmem [shape: f32[8,128], index: 7, kind: input, shape index: {}]
  %s8 = inlined_call_operand.hbm [shape: f32[2,32], index: 8, kind: output, shape index: {}]
  %s9 = sld [smem:[#allocation0]]
  $region46: #{tpu_custom_call.1} parent=0
    _
  %s11 = ssub.s32 1, %s9
  %s12 = scalar_select 0, %s11, %s9
  $region1: #{tpu_custom_call.1} parent=0
    #allocation2 [shape = 'u8[8192]{0}', space=vmem, size = 0x2000, scoped, tag = 'input window, operand 5, single buffered']
    #allocation3 [shape = 's32[1]{0}', space=sflag, size = 0x4, scoped, tag = 'scoped memory for tpu_custom_call.1']
    #allocation4 [shape = 's32[1]{0}', space=sflag, size = 0x4, scoped, tag = 'scoped memory for tpu_custom_call.1']
    #allocation5 [shape = 'u8[1024]{0}', space=vmem, size = 0x400, scoped, tag = 'output window, operand 0, single buffered']
    %13 = vsyncpa [#allocation3], 0
    %14 = vsyncpa [#allocation4], 0
    // Predicated region
    $region2: #{tpu_custom_call.1} parent=1 // pred_check
      _
    $region3: #{tpu_custom_call.1} parent=1 // pred_check_branch
      %16 = sbr.rel (0) target = $region5
    $region4: #{tpu_custom_call.1} parent=1 // pred_region
      _
    $region5: #{tpu_custom_call.1} parent=1 // pred_fallthru
      _
    // Predicated region
    $region6: #{tpu_custom_call.1} parent=1 // pred_check
      _
    $region7: #{tpu_custom_call.1} parent=1 // pred_check_branch
      %18 = sbr.rel (0) target = $region9
    $region8: #{tpu_custom_call.1} parent=1 // pred_region
      _
    $region9: #{tpu_custom_call.1} parent=1 // pred_fallthru
      _
    // Predicated region
    $region10: #{tpu_custom_call.1} parent=1 // pred_check
      _
    $region11: #{tpu_custom_call.1} parent=1 // pred_check_branch
      %20 = sbr.rel (0) target = $region13
    $region12: #{tpu_custom_call.1} parent=1 // pred_region
      _
    $region13: #{tpu_custom_call.1} parent=1 // pred_fallthru
      _
    // Predicated region
    $region14: #{tpu_custom_call.1} parent=1 // pred_check
      _
    $region15: #{tpu_custom_call.1} parent=1 // pred_check_branch
      %22 = sbr.rel (0) target = $region17
    $region16: #{tpu_custom_call.1} parent=1 // pred_region
      _
    $region17: #{tpu_custom_call.1} parent=1 // pred_fallthru
      _
    // Predicated region
    $region18: #{tpu_custom_call.1} parent=1 // pred_check
      _
    $region19: #{tpu_custom_call.1} parent=1 // pred_check_branch
      %24 = sbr.rel (0) target = $region21
    $region20: #{tpu_custom_call.1} parent=1 // pred_region
      _
    $region21: #{tpu_custom_call.1} parent=1 // pred_fallthru
      _
    // Predicated region
    $region22: #{tpu_custom_call.1} parent=1 // pred_check
      _
    $region23: #{tpu_custom_call.1} parent=1 // pred_check_branch
      %26 = sbr.rel (0) target = $region25
    $region24: #{tpu_custom_call.1} parent=1 // pred_region
      %s28 = ssub.s32 256, 256
      %29 = vsyncadd [#allocation3], %s28
      %s30 = sshll.u32 [#allocation2], 4
      %s31 = int_to_ptr.vmem [resolvable:$true] %s30
      %36 = dma.hbm_to_vmem [thread:$0]  %s5, 256, %s31, [#allocation3], 64, 64, 4
    $region25: #{tpu_custom_call.1} parent=1 // pred_fallthru
      _
    // Predicated region
    $region26: #{tpu_custom_call.1} parent=1 // pred_check
      _
    $region27: #{tpu_custom_call.1} parent=1 // pred_check_branch
      %38 = sbr.rel (0) target = $region29
    $region28: #{tpu_custom_call.1} parent=1 // pred_region
      _
    $region29: #{tpu_custom_call.1} parent=1 // pred_fallthru
      _
    // Predicated region
    $region30: #{tpu_custom_call.1} parent=1 // pred_check
      _
    $region31: #{tpu_custom_call.1} parent=1 // pred_check_branch
      %40 = sbr.rel (0) target = $region33
    $region32: #{tpu_custom_call.1} parent=1 // pred_region
      _
    $region33: #{tpu_custom_call.1} parent=1 // pred_fallthru
      _
    // Predicated region
    $region34: #{tpu_custom_call.1} parent=1 // pred_check
      _
    $region35: #{tpu_custom_call.1} parent=1 // pred_check_branch
      %42 = sbr.rel (0) target = $region37
    $region36: #{tpu_custom_call.1} parent=1 // pred_region
      %43 = dma.done [#allocation3], 256
    $region37: #{tpu_custom_call.1} parent=1 // pred_fallthru
      _
    %v45 = vld [vmem:[%s0] sm:$0xff]
    %v46 = vld [vmem:[%s0 + $0x8] sm:$0xff]
    %v47 = vpack.c.bf16 %v46, %v45
    %v48 = vld [vmem:[%s7] sm:$0x1]
    %v49 = vld [vmem:[%s7 + $0x1] sm:$0x1]
    %v50 = vld [vmem:[%s7 + $0x2] sm:$0x1]
    %v51 = vld [vmem:[%s7 + $0x3] sm:$0x1]
    %v52 = vld [vmem:[%s7 + $0x4] sm:$0x1]
    %v53 = vld [vmem:[%s7 + $0x5] sm:$0x1]
    %v54 = vld [vmem:[%s7 + $0x6] sm:$0x1]
    %v55 = vld [vmem:[%s7 + $0x7] sm:$0x1]
    %v56 = vld [vmem:[%s3] sm:$0xf]
    %v57 = vld [vmem:[%s3 + $0x4] sm:$0xf]
    %v58 = vld [vmem:[%s3 + $0x8] sm:$0xf]
    %v59 = vld [vmem:[%s3 + $0xc] sm:$0xf]
    %v60 = vlaneseq
    %v61 = vshrl.u32 %v60, 7
    %v62 = vsub.s32 0, %v61
    %v63 = vrot.slane %v48, %v62
    %v68 = vunpack.c.l.b16 %v56
    %v69 = vunpack.c.l.b16 %v57
    %v70 = vunpack.c.l.b16 %v58
    %v71 = vunpack.c.l.b16 %v59
    %v72 = vpack.c.b16 %v69, %v68
    %v73 = vpack.c.b16 %v71, %v70
    %vm76 = vcmask 261120
    %v78 = vsel %vm76, %v47, 0
    %80 = vmatprep.subr.bf16.mxu0 0
    %81 = vmatpush1.bf16.msra.mxu0 0
    %82 = vmatprep.subr.bf16.mxu0 0
    %83 = vmatpush1.bf16.msra.mxu0 0
    %84 = vmatprep.subr.bf16.mxu0 0
    %85 = vmatpush1.bf16.msra.mxu0 0
    %86 = vmatprep.subr.bf16.mxu0 0
    %87 = vmatpush1.bf16.msra.mxu0 0
    %88 = vmatprep.subr.bf16.mxu0 0
    %89 = vmatpush1.bf16.msra.mxu0 0
    %90 = vmatprep.subr.bf16.mxu0 0
    %91 = vmatpush1.bf16.msra.mxu0 0
    %92 = vmatprep.subr.bf16.mxu0 0
    %93 = vmatpush1.bf16.msra.mxu0 %v73
    %94 = vmatprep.subr.bf16.mxu0 0
    %95 = vmatpush1.bf16.msra.mxu0 %v72
    %96 = vmatprep.subr.bf16.mxu0 0
    %97 = vmatpush2.bf16.msra.mxu0 0
    %98 = vmatprep.subr.bf16.mxu0 0
    %99 = vmatpush2.bf16.msra.mxu0 0
    %100 = vmatprep.subr.bf16.mxu0 0
    %101 = vmatpush2.bf16.msra.mxu0 0
    %102 = vmatprep.subr.bf16.mxu0 0
    %103 = vmatpush2.bf16.msra.mxu0 0
    %104 = vmatprep.subr.bf16.mxu0 0
    %105 = vmatpush2.bf16.msra.mxu0 0
    %106 = vmatprep.subr.bf16.mxu0 0
    %107 = vmatpush2.bf16.msra.mxu0 0
    %108 = vmatprep.subr.bf16.mxu0 0
    %109 = vmatpush2.bf16.msra.mxu0 0
    %110 = vmatprep.subr.bf16.mxu0 0
    %111 = vmatpush2.bf16.msra.mxu0 0
    %112 = vmatprep.mubr.bf16.mxu0 0
    %113 = vmatmul.mubr.bf16.gmra.mxu0 %v78
    %v114 = vpop.f32.mrf.mxu0
    %v115 = vadd.f32 %v63, %v114
    %v116 = vpop.f32.mrf.mxu0
    %v117 = vpop.f32.mrf.mxu0
    %v118 = vadd.f32 %v63, %v117
    %v119 = vpop.f32.mrf.mxu0
    %120 = vdwg.mxu0
    %v121 = vpack.c.bf16 %v118, %v115
    %v122 = vld [vmem:[%s1] sm:$0xff]
    %v123 = vld [vmem:[%s1 + $0x8] sm:$0xff]
    %125 = vrot.lane.b32.xlu0 %v121, 96
    %v126 = vpop.permute.xlu0 %125
    %vm127 = vcmask 130048
    %v129 = vsel %vm127, %v121, 0
    %v132 = vsel %vm127, %v126, 0
    %134 = vmatprep.subr.bf16.mxu0 0
    %135 = vmatpush1.bf16.xpose.msra.mxu0 0
    %136 = vmatprep.subr.bf16.mxu0 0
    %137 = vmatpush1.bf16.xpose.msra.mxu0 0
    %138 = vmatprep.subr.bf16.mxu0 0
    %139 = vmatpush1.bf16.xpose.msra.mxu0 0
    %140 = vmatprep.subr.bf16.mxu0 0
    %141 = vmatpush1.bf16.xpose.msra.mxu0 0
    %142 = vmatprep.subr.bf16.mxu0 0
    %143 = vmatpush1.bf16.xpose.msra.mxu0 0
    %144 = vmatprep.subr.bf16.mxu0 0
    %145 = vmatpush1.bf16.xpose.msra.mxu0 0
    %146 = vmatprep.subr.bf16.mxu0 0
    %147 = vmatpush1.bf16.xpose.msra.mxu0 0
    %148 = vmatprep.subr.bf16.mxu0 0
    %149 = vmatpush1.bf16.xpose.msra.mxu0 %v132
    %150 = vmatprep.subr.bf16.mxu0 0
    %151 = vmatpush2.bf16.xpose.msra.mxu0 0
    %152 = vmatprep.subr.bf16.mxu0 0
    %153 = vmatpush2.bf16.xpose.msra.mxu0 0
    %154 = vmatprep.subr.bf16.mxu0 0
    %155 = vmatpush2.bf16.xpose.msra.mxu0 0
    %156 = vmatprep.subr.bf16.mxu0 0
    %157 = vmatpush2.bf16.xpose.msra.mxu0 0
    %158 = vmatprep.subr.bf16.mxu0 0
    %159 = vmatpush2.bf16.xpose.msra.mxu0 0
    %160 = vmatprep.subr.bf16.mxu0 0
    %161 = vmatpush2.bf16.xpose.msra.mxu0 0
    %162 = vmatprep.subr.bf16.mxu0 0
    %163 = vmatpush2.bf16.xpose.msra.mxu0 0
    %164 = vmatprep.subr.bf16.mxu0 0
    %165 = vmatpush2.bf16.xpose.msra.mxu0 0
    %166 = vmatprep.mubr.bf16.mxu0 0
    %167 = vmatmul.mubr.bf16.gmra.mxu0 %v129
    %v168 = vpop.f32.mrf.mxu0
    %v169 = vadd.f32 %v122, %v168
    %v170 = vpop.f32.mrf.mxu0
    %v171 = vpop.f32.mrf.mxu0
    %v172 = vadd.f32 %v123, %v171
    %v173 = vpop.f32.mrf.mxu0
    %174 = vdwg.mxu0
    %v175 = vsel %vm127, %v169, -inf
    %176 = vmax.xlane.f32.xlu0 %v175
    %v177 = vpop.xlane.xlu0 %176
    %v178 = vsel %vm127, %v172, -inf
    %179 = vmax.xlane.f32.xlu0 %v178
    %v180 = vpop.xlane.xlu0 %179
    %v181 = vsub.f32 %v169, %v177
    %v182 = vsub.f32 %v172, %v180
    %v183 = vmul.f32 %v181, 1.442695
    %v184 = vpow.pop %v183
    %v185 = vmul.f32 %v182, 1.442695
    %v186 = vpow.pop %v185
    %v187 = vsel %vm127, %v184, 0.0
    %188 = vadd.xlane.f32.xlu0 %v187
    %v189 = vpop.xlane.xlu0 %188
    %v190 = vsel %vm127, %v186, 0.0
    %191 = vadd.xlane.f32.xlu0 %v190
    %v192 = vpop.xlane.xlu0 %191
    %v193 = vrcp.pop %v189
    %v194 = vrcp.pop %v192
    %v195 = vmul.f32 %v184, %v193
    %v196 = vmul.f32 %v186, %v194
    %v197 = vpack.c.bf16 %v196, %v195
    %198 = vrot.lane.b32.xlu0 %v121, 64
    %v199 = vpop.permute.xlu0 %198
    %v202 = vsel %vm127, %v197, 0
    %204 = vmatprep.subr.bf16.mxu0 0
    %205 = vmatpush1.bf16.msra.mxu0 0
    %206 = vmatprep.subr.bf16.mxu0 0
    %207 = vmatpush1.bf16.msra.mxu0 0
    %208 = vmatprep.subr.bf16.mxu0 0
    %209 = vmatpush1.bf16.msra.mxu0 0
    %210 = vmatprep.subr.bf16.mxu0 0
    %211 = vmatpush1.bf16.msra.mxu0 0
    %212 = vmatprep.subr.bf16.mxu0 0
    %213 = vmatpush1.bf16.msra.mxu0 0
    %214 = vmatprep.subr.bf16.mxu0 0
    %215 = vmatpush1.bf16.msra.mxu0 0
    %216 = vmatprep.subr.bf16.mxu0 0
    %217 = vmatpush1.bf16.msra.mxu0 0
    %218 = vmatprep.subr.bf16.mxu0 0
    %219 = vmatpush1.bf16.msra.mxu0 %v199
    %220 = vmatprep.subr.bf16.mxu0 0
    %221 = vmatpush2.bf16.msra.mxu0 0
    %222 = vmatprep.subr.bf16.mxu0 0
    %223 = vmatpush2.bf16.msra.mxu0 0
    %224 = vmatprep.subr.bf16.mxu0 0
    %225 = vmatpush2.bf16.msra.mxu0 0
    %226 = vmatprep.subr.bf16.mxu0 0
    %227 = vmatpush2.bf16.msra.mxu0 0
    %228 = vmatprep.subr.bf16.mxu0 0
    %229 = vmatpush2.bf16.msra.mxu0 0
    %230 = vmatprep.subr.bf16.mxu0 0
    %231 = vmatpush2.bf16.msra.mxu0 0
    %232 = vmatprep.subr.bf16.mxu0 0
    %233 = vmatpush2.bf16.msra.mxu0 0
    %234 = vmatprep.subr.bf16.mxu0 0
    %235 = vmatpush2.bf16.msra.mxu0 0
    %236 = vmatprep.mubr.bf16.mxu0 0
    %237 = vmatmul.mubr.bf16.gmra.mxu0 %v202
    %v238 = vpop.f32.mrf.mxu0
    %v239 = vadd.f32 0.0, %v238
    %v240 = vpop.f32.mrf.mxu0
    %v241 = vpop.f32.mrf.mxu0
    %v242 = vadd.f32 0.0, %v241
    %v243 = vpop.f32.mrf.mxu0
    %244 = vdwg.mxu0
    %245 = vrot.lane.b32.xlu0 %v121, 112
    %v246 = vpop.permute.xlu0 %245
    %247 = vrot.lane.b32.xlu0 %v121, 80
    %v248 = vpop.permute.xlu0 %247
    %v250 = vsel %vm127, %v246, 0
    %v253 = vsel %vm127, %v248, 0
    %255 = vmatprep.subr.bf16.mxu0 0
    %256 = vmatpush1.bf16.xpose.msra.mxu0 0
    %257 = vmatprep.subr.bf16.mxu0 0
    %258 = vmatpush1.bf16.xpose.msra.mxu0 0
    %259 = vmatprep.subr.bf16.mxu0 0
    %260 = vmatpush1.bf16.xpose.msra.mxu0 0
    %261 = vmatprep.subr.bf16.mxu0 0
    %262 = vmatpush1.bf16.xpose.msra.mxu0 0
    %263 = vmatprep.subr.bf16.mxu0 0
    %264 = vmatpush1.bf16.xpose.msra.mxu0 0
    %265 = vmatprep.subr.bf16.mxu0 0
    %266 = vmatpush1.bf16.xpose.msra.mxu0 0
    %267 = vmatprep.subr.bf16.mxu0 0
    %268 = vmatpush1.bf16.xpose.msra.mxu0 0
    %269 = vmatprep.subr.bf16.mxu0 0
    %270 = vmatpush1.bf16.xpose.msra.mxu0 %v253
    %271 = vmatprep.subr.bf16.mxu0 0
    %272 = vmatpush2.bf16.xpose.msra.mxu0 0
    %273 = vmatprep.subr.bf16.mxu0 0
    %274 = vmatpush2.bf16.xpose.msra.mxu0 0
    %275 = vmatprep.subr.bf16.mxu0 0
    %276 = vmatpush2.bf16.xpose.msra.mxu0 0
    %277 = vmatprep.subr.bf16.mxu0 0
    %278 = vmatpush2.bf16.xpose.msra.mxu0 0
    %279 = vmatprep.subr.bf16.mxu0 0
    %280 = vmatpush2.bf16.xpose.msra.mxu0 0
    %281 = vmatprep.subr.bf16.mxu0 0
    %282 = vmatpush2.bf16.xpose.msra.mxu0 0
    %283 = vmatprep.subr.bf16.mxu0 0
    %284 = vmatpush2.bf16.xpose.msra.mxu0 0
    %285 = vmatprep.subr.bf16.mxu0 0
    %286 = vmatpush2.bf16.xpose.msra.mxu0 0
    %287 = vmatprep.mubr.bf16.mxu0 0
    %288 = vmatmul.mubr.bf16.gmra.mxu0 %v250
    %v289 = vpop.f32.mrf.mxu0
    %v290 = vadd.f32 %v122, %v289
    %v291 = vpop.f32.mrf.mxu0
    %v292 = vpop.f32.mrf.mxu0
    %v293 = vadd.f32 %v123, %v292
    %v294 = vpop.f32.mrf.mxu0
    %295 = vdwg.mxu0
    %v296 = vsel %vm127, %v290, -inf
    %297 = vmax.xlane.f32.xlu0 %v296
    %v298 = vpop.xlane.xlu0 %297
    %v299 = vsel %vm127, %v293, -inf
    %300 = vmax.xlane.f32.xlu0 %v299
    %v301 = vpop.xlane.xlu0 %300
    %v302 = vsub.f32 %v290, %v298
    %v303 = vsub.f32 %v293, %v301
    %v304 = vmul.f32 %v302, 1.442695
    %v305 = vpow.pop %v304
    %v306 = vmul.f32 %v303, 1.442695
    %v307 = vpow.pop %v306
    %v308 = vsel %vm127, %v305, 0.0
    %309 = vadd.xlane.f32.xlu0 %v308
    %v310 = vpop.xlane.xlu0 %309
    %v311 = vsel %vm127, %v307, 0.0
    %312 = vadd.xlane.f32.xlu0 %v311
    %v313 = vpop.xlane.xlu0 %312
    %v314 = vrcp.pop %v310
    %v315 = vrcp.pop %v313
    %v316 = vmul.f32 %v305, %v314
    %v317 = vmul.f32 %v307, %v315
    %v318 = vpack.c.bf16 %v317, %v316
    %319 = vrot.lane.b32.xlu0 %v121, 48
    %v320 = vpop.permute.xlu0 %319
    %v323 = vsel %vm127, %v318, 0
    %325 = vmatprep.subr.bf16.mxu0 0
    %326 = vmatpush1.bf16.msra.mxu0 0
    %327 = vmatprep.subr.bf16.mxu0 0
    %328 = vmatpush1.bf16.msra.mxu0 0
    %329 = vmatprep.subr.bf16.mxu0 0
    %330 = vmatpush1.bf16.msra.mxu0 0
    %331 = vmatprep.subr.bf16.mxu0 0
    %332 = vmatpush1.bf16.msra.mxu0 0
    %333 = vmatprep.subr.bf16.mxu0 0
    %334 = vmatpush1.bf16.msra.mxu0 0
    %335 = vmatprep.subr.bf16.mxu0 0
    %336 = vmatpush1.bf16.msra.mxu0 0
    %337 = vmatprep.subr.bf16.mxu0 0
    %338 = vmatpush1.bf16.msra.mxu0 0
    %339 = vmatprep.subr.bf16.mxu0 0
    %340 = vmatpush1.bf16.msra.mxu0 %v320
    %341 = vmatprep.subr.bf16.mxu0 0
    %342 = vmatpush2.bf16.msra.mxu0 0
    %343 = vmatprep.subr.bf16.mxu0 0
    %344 = vmatpush2.bf16.msra.mxu0 0
    %345 = vmatprep.subr.bf16.mxu0 0
    %346 = vmatpush2.bf16.msra.mxu0 0
    %347 = vmatprep.subr.bf16.mxu0 0
    %348 = vmatpush2.bf16.msra.mxu0 0
    %349 = vmatprep.subr.bf16.mxu0 0
    %350 = vmatpush2.bf16.msra.mxu0 0
    %351 = vmatprep.subr.bf16.mxu0 0
    %352 = vmatpush2.bf16.msra.mxu0 0
    %353 = vmatprep.subr.bf16.mxu0 0
    %354 = vmatpush2.bf16.msra.mxu0 0
    %355 = vmatprep.subr.bf16.mxu0 0
    %356 = vmatpush2.bf16.msra.mxu0 0
    %357 = vmatprep.mubr.bf16.mxu0 0
    %358 = vmatmul.mubr.bf16.gmra.mxu0 %v323
    %v359 = vpop.f32.mrf.mxu0
    %v360 = vadd.f32 0.0, %v359
    %v361 = vpop.f32.mrf.mxu0
    %v362 = vpop.f32.mrf.mxu0
    %v363 = vadd.f32 0.0, %v362
    %v364 = vpop.f32.mrf.mxu0
    %365 = vdwg.mxu0
    %368 = vrot.lane.b32.xlu0 %v360, 16
    %v369 = vpop.permute.xlu0 %368
    %370 = vrot.lane.b32.xlu0 %v363, 16
    %v371 = vpop.permute.xlu0 %370
    %v374 = vsel %vm127, %v239, %v369
    %v375 = vsel %vm127, %v242, %v371
    %v376 = vpack.c.bf16 %v375, %v374
    %v377 = vld [vmem:[%s4] sm:$0xf]
    %v378 = vld [vmem:[%s4 + $0x4] sm:$0xf]
    %v379 = vld [vmem:[%s4 + $0x8] sm:$0xf]
    %v380 = vld [vmem:[%s4 + $0xc] sm:$0xf]
    %v381 = vlaneseq
    %v382 = vshrl.u32 %v381, 7
    %v383 = vsub.s32 0, %v382
    %v384 = vrot.slane %v49, %v383
    %v389 = vunpack.c.l.b16 %v377
    %v390 = vunpack.c.l.b16 %v378
    %v391 = vunpack.c.l.b16 %v379
    %v392 = vunpack.c.l.b16 %v380
    %v393 = vpack.c.b16 %v390, %v389
    %v394 = vpack.c.b16 %v392, %v391
    %v398 = vsel %vm76, %v376, 0
    %400 = vmatprep.subr.bf16.mxu0 0
    %401 = vmatpush1.bf16.msra.mxu0 0
    %402 = vmatprep.subr.bf16.mxu0 0
    %403 = vmatpush1.bf16.msra.mxu0 0
    %404 = vmatprep.subr.bf16.mxu0 0
    %405 = vmatpush1.bf16.msra.mxu0 0
    %406 = vmatprep.subr.bf16.mxu0 0
    %407 = vmatpush1.bf16.msra.mxu0 0
    %408 = vmatprep.subr.bf16.mxu0 0
    %409 = vmatpush1.bf16.msra.mxu0 0
    %410 = vmatprep.subr.bf16.mxu0 0
    %411 = vmatpush1.bf16.msra.mxu0 0
    %412 = vmatprep.subr.bf16.mxu0 0
    %413 = vmatpush1.bf16.msra.mxu0 %v394
    %414 = vmatprep.subr.bf16.mxu0 0
    %415 = vmatpush1.bf16.msra.mxu0 %v393
    %416 = vmatprep.subr.bf16.mxu0 0
    %417 = vmatpush2.bf16.msra.mxu0 0
    %418 = vmatprep.subr.bf16.mxu0 0
    %419 = vmatpush2.bf16.msra.mxu0 0
    %420 = vmatprep.subr.bf16.mxu0 0
    %421 = vmatpush2.bf16.msra.mxu0 0
    %422 = vmatprep.subr.bf16.mxu0 0
    %423 = vmatpush2.bf16.msra.mxu0 0
    %424 = vmatprep.subr.bf16.mxu0 0
    %425 = vmatpush2.bf16.msra.mxu0 0
    %426 = vmatprep.subr.bf16.mxu0 0
    %427 = vmatpush2.bf16.msra.mxu0 0
    %428 = vmatprep.subr.bf16.mxu0 0
    %429 = vmatpush2.bf16.msra.mxu0 0
    %430 = vmatprep.subr.bf16.mxu0 0
    %431 = vmatpush2.bf16.msra.mxu0 0
    %432 = vmatprep.mubr.bf16.mxu0 0
    %433 = vmatmul.mubr.bf16.gmra.mxu0 %v398
    %v434 = vpop.f32.mrf.mxu0
    %v435 = vadd.f32 %v384, %v434
    %v436 = vpop.f32.mrf.mxu0
    %v437 = vpop.f32.mrf.mxu0
    %v438 = vadd.f32 %v384, %v437
    %v439 = vpop.f32.mrf.mxu0
    %440 = vdwg.mxu0
    %v441 = vadd.f32 %v45, %v435
    %v442 = vadd.f32 %v46, %v438
    %v443 = vsel %vm76, %v441, 0.0
    %444 = vadd.xlane.f32.xlu0 %v443
    %v445 = vpop.xlane.xlu0 %444
    %v446 = vsel %vm76, %v442, 0.0
    %447 = vadd.xlane.f32.xlu0 %v446
    %v448 = vpop.xlane.xlu0 %447
    %v449 = vrcp.pop 32.0
    %v450 = vmul.f32 %v445, %v449
    %v451 = vmul.f32 %v448, %v449
    %v452 = vsub.f32 %v441, %v450
    %v453 = vsub.f32 %v442, %v451
    %v454 = vmul.f32 %v452, %v452
    %v455 = vmul.f32 %v453, %v453
    %v456 = vsel %vm76, %v454, 0.0
    %457 = vadd.xlane.f32.xlu0 %v456
    %v458 = vpop.xlane.xlu0 %457
    %v459 = vsel %vm76, %v455, 0.0
    %460 = vadd.xlane.f32.xlu0 %v459
    %v461 = vpop.xlane.xlu0 %460
    %v462 = vmul.f32 %v458, %v449
    %v463 = vmul.f32 %v461, %v449
    %v464 = vadd.f32 %v462, 1e-12
    %v465 = vadd.f32 %v463, 1e-12
    %v466 = vrsqrt.pop %v464
    %v467 = vrsqrt.pop %v465
    %v468 = vmul.f32 %v452, %v466
    %v469 = vmul.f32 %v453, %v467
    %v470 = vlaneseq
    %v471 = vshrl.u32 %v470, 7
    %v472 = vsub.s32 0, %v471
    %v473 = vrot.slane %v50, %v472
    %v474 = vmul.f32 %v468, %v473
    %v475 = vmul.f32 %v469, %v473
    %v476 = vlaneseq
    %v477 = vshrl.u32 %v476, 7
    %v478 = vsub.s32 0, %v477
    %v479 = vrot.slane %v51, %v478
    %v480 = vadd.f32 %v474, %v479
    %v481 = vadd.f32 %v475, %v479
    %v482 = vpack.c.bf16 %v481, %v480
    %v483 = vld [vmem:[#allocation2] sm:$0xf]
    %v484 = vld [vmem:[#allocation2 + $0x4] sm:$0xf]
    %v485 = vld [vmem:[#allocation2 + $0x8] sm:$0xf]
    %v486 = vld [vmem:[#allocation2 + $0xc] sm:$0xf]
    %v487 = vlaneseq
    %v488 = vshrl.u32 %v487, 7
    %v489 = vsub.s32 0, %v488
    %v490 = vrot.slane %v52, %v489
    %v495 = vunpack.c.l.b16 %v483
    %v496 = vunpack.c.l.b16 %v484
    %v497 = vunpack.c.l.b16 %v485
    %v498 = vunpack.c.l.b16 %v486
    %v499 = vpack.c.b16 %v496, %v495
    %v500 = vpack.c.b16 %v498, %v497
    %v504 = vsel %vm76, %v482, 0
    %506 = vmatprep.subr.bf16.mxu0 0
    %507 = vmatpush1.bf16.msra.mxu0 0
    %508 = vmatprep.subr.bf16.mxu0 0
    %509 = vmatpush1.bf16.msra.mxu0 0
    %510 = vmatprep.subr.bf16.mxu0 0
    %511 = vmatpush1.bf16.msra.mxu0 0
    %512 = vmatprep.subr.bf16.mxu0 0
    %513 = vmatpush1.bf16.msra.mxu0 0
    %514 = vmatprep.subr.bf16.mxu0 0
    %515 = vmatpush1.bf16.msra.mxu0 0
    %516 = vmatprep.subr.bf16.mxu0 0
    %517 = vmatpush1.bf16.msra.mxu0 0
    %518 = vmatprep.subr.bf16.mxu0 0
    %519 = vmatpush1.bf16.msra.mxu0 %v500
    %520 = vmatprep.subr.bf16.mxu0 0
    %521 = vmatpush1.bf16.msra.mxu0 %v499
    %522 = vmatprep.subr.bf16.mxu0 0
    %523 = vmatpush2.bf16.msra.mxu0 0
    %524 = vmatprep.subr.bf16.mxu0 0
    %525 = vmatpush2.bf16.msra.mxu0 0
    %526 = vmatprep.subr.bf16.mxu0 0
    %527 = vmatpush2.bf16.msra.mxu0 0
    %528 = vmatprep.subr.bf16.mxu0 0
    %529 = vmatpush2.bf16.msra.mxu0 0
    %530 = vmatprep.subr.bf16.mxu0 0
    %531 = vmatpush2.bf16.msra.mxu0 0
    %532 = vmatprep.subr.bf16.mxu0 0
    %533 = vmatpush2.bf16.msra.mxu0 0
    %534 = vmatprep.subr.bf16.mxu0 0
    %535 = vmatpush2.bf16.msra.mxu0 0
    %536 = vmatprep.subr.bf16.mxu0 0
    %537 = vmatpush2.bf16.msra.mxu0 0
    %538 = vmatprep.mubr.bf16.mxu0 0
    %539 = vmatmul.mubr.bf16.gmra.mxu0 %v504
    %v540 = vpop.f32.mrf.mxu0
    %v541 = vadd.f32 %v490, %v540
    %v542 = vpop.f32.mrf.mxu0
    %v543 = vpop.f32.mrf.mxu0
    %v544 = vadd.f32 %v490, %v543
    %v545 = vpop.f32.mrf.mxu0
    %546 = vdwg.mxu0
    %v547 = vmul.f32 %v541, %v541
    %v548 = vmul.f32 %v544, %v544
    %v549 = vmul.f32 %v541, %v547
    %v550 = vmul.f32 %v544, %v548
    %v551 = vmul.f32 %v549, 0.044715
    %v552 = vmul.f32 %v550, 0.044715
    %v553 = vadd.f32 %v541, %v551
    %v554 = vadd.f32 %v544, %v552
    %v555 = vmul.f32 %v553, 0.7978846
    %v556 = vmul.f32 %v554, 0.7978846
    %v557 = vtanh.pop %v555
    %v558 = vtanh.pop %v556
    %v559 = vadd.f32 %v557, 1.0
    %v560 = vadd.f32 %v558, 1.0
    %v561 = vmul.f32 %v559, 0.5
    %v562 = vmul.f32 %v560, 0.5
    %v563 = vmul.f32 %v541, %v561
    %v564 = vmul.f32 %v544, %v562
    %v565 = vpack.c.bf16 %v564, %v563
    %v566 = vld [vmem:[%s6] sm:$0xf]
    %v567 = vld [vmem:[%s6 + $0x4] sm:$0xf]
    %v568 = vld [vmem:[%s6 + $0x8] sm:$0xf]
    %v569 = vld [vmem:[%s6 + $0xc] sm:$0xf]
    %v570 = vld [vmem:[%s6 + $0x10] sm:$0xf]
    %v571 = vld [vmem:[%s6 + $0x14] sm:$0xf]
    %v572 = vld [vmem:[%s6 + $0x18] sm:$0xf]
    %v573 = vld [vmem:[%s6 + $0x1c] sm:$0xf]
    %v574 = vlaneseq
    %v575 = vshrl.u32 %v574, 7
    %v576 = vsub.s32 0, %v575
    %v577 = vrot.slane %v53, %v576
    %v586 = vunpack.c.l.b16 %v566
    %v587 = vunpack.c.l.b16 %v567
    %v588 = vunpack.c.l.b16 %v568
    %v589 = vunpack.c.l.b16 %v569
    %v590 = vunpack.c.l.b16 %v570
    %v591 = vunpack.c.l.b16 %v571
    %v592 = vunpack.c.l.b16 %v572
    %v593 = vunpack.c.l.b16 %v573
    %v594 = vpack.c.b16 %v587, %v586
    %v595 = vpack.c.b16 %v589, %v588
    %v596 = vpack.c.b16 %v591, %v590
    %v597 = vpack.c.b16 %v593, %v592
    %vm602 = vcmask 523264
    %v604 = vsel %vm602, %v565, 0
    %606 = vmatprep.subr.bf16.mxu0 0
    %607 = vmatpush1.bf16.msra.mxu0 0
    %608 = vmatprep.subr.bf16.mxu0 0
    %609 = vmatpush1.bf16.msra.mxu0 0
    %610 = vmatprep.subr.bf16.mxu0 0
    %611 = vmatpush1.bf16.msra.mxu0 0
    %612 = vmatprep.subr.bf16.mxu0 0
    %613 = vmatpush1.bf16.msra.mxu0 0
    %614 = vmatprep.subr.bf16.mxu0 0
    %615 = vmatpush1.bf16.msra.mxu0 %v597
    %616 = vmatprep.subr.bf16.mxu0 0
    %617 = vmatpush1.bf16.msra.mxu0 %v596
    %618 = vmatprep.subr.bf16.mxu0 0
    %619 = vmatpush1.bf16.msra.mxu0 %v595
    %620 = vmatprep.subr.bf16.mxu0 0
    %621 = vmatpush1.bf16.msra.mxu0 %v594
    %622 = vmatprep.subr.bf16.mxu0 0
    %623 = vmatpush2.bf16.msra.mxu0 0
    %624 = vmatprep.subr.bf16.mxu0 0
    %625 = vmatpush2.bf16.msra.mxu0 0
    %626 = vmatprep.subr.bf16.mxu0 0
    %627 = vmatpush2.bf16.msra.mxu0 0
    %628 = vmatprep.subr.bf16.mxu0 0
    %629 = vmatpush2.bf16.msra.mxu0 0
    %630 = vmatprep.subr.bf16.mxu0 0
    %631 = vmatpush2.bf16.msra.mxu0 0
    %632 = vmatprep.subr.bf16.mxu0 0
    %633 = vmatpush2.bf16.msra.mxu0 0
    %634 = vmatprep.subr.bf16.mxu0 0
    %635 = vmatpush2.bf16.msra.mxu0 0
    %636 = vmatprep.subr.bf16.mxu0 0
    %637 = vmatpush2.bf16.msra.mxu0 0
    %638 = vmatprep.mubr.bf16.mxu0 0
    %639 = vmatmul.mubr.bf16.gmra.mxu0 %v604
    %v640 = vpop.f32.mrf.mxu0
    %v641 = vadd.f32 %v577, %v640
    %v642 = vpop.f32.mrf.mxu0
    %v643 = vpop.f32.mrf.mxu0
    %v644 = vadd.f32 %v577, %v643
    %v645 = vpop.f32.mrf.mxu0
    %646 = vdwg.mxu0
    %v647 = vadd.f32 %v480, %v641
    %v648 = vadd.f32 %v481, %v644
    %v649 = vsel %vm76, %v647, 0.0
    %650 = vadd.xlane.f32.xlu0 %v649
    %v651 = vpop.xlane.xlu0 %650
    %v652 = vsel %vm76, %v648, 0.0
    %653 = vadd.xlane.f32.xlu0 %v652
    %v654 = vpop.xlane.xlu0 %653
    %v655 = vmul.f32 %v651, %v449
    %v656 = vmul.f32 %v654, %v449
    %v657 = vsub.f32 %v647, %v655
    %v658 = vsub.f32 %v648, %v656
    %v659 = vmul.f32 %v657, %v657
    %v660 = vmul.f32 %v658, %v658
    %v661 = vsel %vm76, %v659, 0.0
    %662 = vadd.xlane.f32.xlu0 %v661
    %v663 = vpop.xlane.xlu0 %662
    %v664 = vsel %vm76, %v660, 0.0
    %665 = vadd.xlane.f32.xlu0 %v664
    %v666 = vpop.xlane.xlu0 %665
    %v667 = vmul.f32 %v663, %v449
    %v668 = vmul.f32 %v666, %v449
    %v669 = vadd.f32 %v667, 1e-12
    %v670 = vadd.f32 %v668, 1e-12
    %v671 = vrsqrt.pop %v669
    %v672 = vrsqrt.pop %v670
    %v673 = vmul.f32 %v657, %v671
    %v674 = vmul.f32 %v658, %v672
    %v675 = vlaneseq
    %v676 = vshrl.u32 %v675, 7
    %v677 = vsub.s32 0, %v676
    %v678 = vrot.slane %v54, %v677
    %v679 = vmul.f32 %v673, %v678
    %v680 = vmul.f32 %v674, %v678
    %v681 = vlaneseq
    %v682 = vshrl.u32 %v681, 7
    %v683 = vsub.s32 0, %v682
    %v684 = vrot.slane %v55, %v683
    %v685 = vadd.f32 %v679, %v684
    %v686 = vadd.f32 %v680, %v684
    %v687 = vld [vmem:[%s2] sm:$0xff]
    %v688 = vld [vmem:[%s2 + $0x8] sm:$0xff]
    %690 = vset.pattern.permute.xlu0 0
    %691 = vperm.xlu0 %690, %v687
    %v692 = vpop.permute.xlu0 %691
    %695 = vset.pattern.permute.xlu0 0
    %696 = vperm.xlu0 %695, %v688
    %v697 = vpop.permute.xlu0 %696
    %v699 = vmul.f32 %v685, %v692
    %v700 = vmul.f32 %v686, %v697
    %v701 = vsel %vm76, %v699, 0.0
    %v702 = vrot.slane %v701, 4
    %v703 = vadd.f32 %v701, %v702
    %v704 = vrot.slane %v703, 2
    %v705 = vadd.f32 %v703, %v704
    %v706 = vrot.slane %v705, 1
    %v707 = vadd.f32 %v705, %v706
    %v708 = vsel %vm76, %v700, 0.0
    %v709 = vrot.slane %v708, 4
    %v710 = vadd.f32 %v708, %v709
    %v711 = vrot.slane %v710, 2
    %v712 = vadd.f32 %v710, %v711
    %v713 = vrot.slane %v712, 1
    %v714 = vadd.f32 %v712, %v713
    %v715 = vmul.f32 %v707, %v707
    %v716 = vmul.f32 %v714, %v714
    %vm719 = vcmask 1041409
    %v720 = vsel %vm719, %v716, %v715
    %vm722 = vcmask 254976
    %v723 = vsel %vm722, %v720, 0.0
    %724 = vadd.xlane.f32.xlu0 %v723
    %v725 = vpop.xlane.xlu0 %724
    %v726 = vmax.f32 %v725, 1e-24
    %v727 = vrsqrt.pop %v726
    %v729 = vrot.slane %v727, 1
    %v732 = vmul.f32 %v707, %v727
    %v733 = vmul.f32 %v714, %v729
    %v736 = vrot.slane %v733, 7
    %v737 = vsel %vm719, %v736, %v732
    %739 = vst.msk [vmem:[#allocation5] sm:$0x3] %vm722, %v737
    // Predicated region
    $region38: #{tpu_custom_call.1} parent=1 // pred_check
      _
    $region39: #{tpu_custom_call.1} parent=1 // pred_check_branch
      %741 = sbr.rel (0) target = $region41
    $region40: #{tpu_custom_call.1} parent=1 // pred_region
      %s743 = ssub.s32 32, 32
      %744 = vsyncadd [#allocation4], %s743
      %s746 = sshll.u32 [#allocation5], 4
      %s747 = int_to_ptr.vmem [resolvable:$true] %s746
      %749 = dma.vmem_to_hbm [thread:$0]  %s747, 32, %s8, [#allocation4]
    $region41: #{tpu_custom_call.1} parent=1 // pred_fallthru
      _
    // Predicated region
    $region42: #{tpu_custom_call.1} parent=1 // pred_check
      _
    $region43: #{tpu_custom_call.1} parent=1 // pred_check_branch
      %751 = sbr.rel (0) target = $region45
    $region44: #{tpu_custom_call.1} parent=1 // pred_region
      %752 = dma.done [#allocation4], 32
    $region45: #{tpu_custom_call.1} parent=1 // pred_fallthru
      _
    %753 = vsyncpa [#allocation3], 1
    %754 = vsyncpa [#allocation4], 1

</llo_original>
